<compile_context>
chip_gen: v5e
topology: v5e:2x2
jax: 0.10.0
libtpu: 0.0.40
codegen_flags: <defaults>
</compile_context>

<pallas_src>
import functools

import jax
import jax.numpy as jnp
from jax.experimental import pallas as pl
from jax.experimental import pallas as _pl_unused  # keep namespace explicit
from jax.experimental.pallas import tpu as pltpu  # noqa: F401  (TPU backend; CompilerParams for production path)

_LANE = 128      # lane width of a vreg (last dim)
_SUBLANE = 8     # f32 sublane count (second-to-last dim)


def _round_up(x: int, m: int) -> int:
    return (x + m - 1) // m * m


def _pad2d(a, rows: int, cols: int):
    r, c = a.shape
    return jnp.pad(a, ((0, rows - r), (0, cols - c)))


# ---------------------------- fused multi-layer MLP kernel ----------------------------


def _fused_mlp_kernel(*refs, num_layers: int):
    """Whole layer stack in one kernel: activations never leave VMEM/vregs."""
    if num_layers > 0:
        (x_ref, w1_ref, b1_ref, win_ref, bin_ref, wout_ref, bout_ref,
         w2_ref, b2_ref, o_ref) = refs
    else:
        x_ref, w1_ref, b1_ref, w2_ref, b2_ref, o_ref = refs
        win_ref = bin_ref = wout_ref = bout_ref = None

    def mm(a_f32, w_bf16):
        # bf16 MXU inputs, f32 accumulation.
        return jnp.dot(a_f32.astype(jnp.bfloat16), w_bf16,
                       preferred_element_type=jnp.float32)

    h = mm(x_ref[...], w1_ref[...])
    h = jnp.maximum(h + b1_ref[...], 0.0)                     # linear_1 + ReLU (f32 VPU)

    # Static unroll: layer count is tiny and known at trace time.
    for l in range(num_layers):
        h = jnp.maximum(mm(h, win_ref[l]) + bin_ref[l], 0.0)  # proj_in + ReLU
        h = mm(h, wout_ref[l]) + bout_ref[l]                  # proj_out

    y = mm(h, w2_ref[...]) + b2_ref[...]                      # linear_2
    o_ref[...] = y.astype(o_ref.dtype)                        # lane-dense store


# ---------------- parameter construction (deterministic, PyTorch-like init) -------------


def _init_linear(key, fan_in, fan_out, dtype=jnp.float32):
    kw, kb = jax.random.split(key)
    bound = 1.0 / jnp.sqrt(jnp.float32(fan_in))
    # stored as (in, out) — already "transposed" relative to torch's (out, in)
    w = jax.random.uniform(kw, (fan_in, fan_out), dtype, minval=-bound, maxval=bound)
    b = jax.random.uniform(kb, (fan_out,), dtype, minval=-bound, maxval=bound)
    return w, b


def init_dummy_model(key, in_features, hidden_features, out_features, num_layers):
    keys = jax.random.split(key, 2 + 2 * num_layers)
    params = {}
    params["linear_1"] = _init_linear(keys[0], in_features, hidden_features)
    blocks = []
    for i in range(num_layers):
        proj_in = _init_linear(keys[1 + 2 * i], hidden_features, hidden_features)
        proj_out = _init_linear(keys[2 + 2 * i], hidden_features, hidden_features)
        blocks.append({"proj_in": proj_in, "proj_out": proj_out})
    params["blocks"] = blocks
    params["linear_2"] = _init_linear(keys[1 + 2 * num_layers], hidden_features, out_features)
    return params


# ------- one-time packing: pad to lane-aligned tiles, bf16 weights, stacked blocks -------


def pack_params(params):
    w1, b1 = params["linear_1"]
    w2, b2 = params["linear_2"]
    in_f, hid = w1.shape
    _, out_f = w2.shape
    blocks = params["blocks"]
    num_layers = len(blocks)

    k_pad = _round_up(in_f, _LANE)
    h_pad = _round_up(hid, _LANE)
    n_pad = _round_up(out_f, _LANE)

    wdt = jnp.bfloat16                         # MXU-native; biases stay f32 for the VPU adds
    weights = {
        "w1": _pad2d(w1, k_pad, h_pad).astype(wdt),
        "b1": _pad2d(b1.reshape(1, -1), 1, h_pad),
        "w2": _pad2d(w2, h_pad, n_pad).astype(wdt),
        "b2": _pad2d(b2.reshape(1, -1), 1, n_pad),
    }
    if num_layers > 0:
        weights["w_in"] = jnp.stack(
            [_pad2d(b["proj_in"][0], h_pad, h_pad) for b in blocks]).astype(wdt)
        weights["b_in"] = jnp.stack(
            [_pad2d(b["proj_in"][1].reshape(1, -1), 1, h_pad) for b in blocks])
        weights["w_out"] = jnp.stack(
            [_pad2d(b["proj_out"][0], h_pad, h_pad) for b in blocks]).astype(wdt)
        weights["b_out"] = jnp.stack(
            [_pad2d(b["proj_out"][1].reshape(1, -1), 1, h_pad) for b in blocks])

    dims = (in_f, hid, out_f, num_layers, k_pad, h_pad, n_pad)
    return weights, dims


# ------------- forward: ONE jitted executable (pad -> single pallas_call -> slice) -------


@functools.partial(jax.jit, static_argnames=("dims",))
def dummy_model_forward(x, weights, *, dims):
    in_f, hid, out_f, num_layers, k_pad, h_pad, n_pad = dims
    batch = x.shape[0]
    m_pad = _round_up(max(batch, _SUBLANE), _SUBLANE)

    x_p = _pad2d(x.astype(jnp.float32), m_pad, k_pad)   # fused into this executable by jit

    in_specs = [
        pl.BlockSpec((m_pad, k_pad), lambda: (0, 0)),            # x
        pl.BlockSpec((k_pad, h_pad), lambda: (0, 0)),            # w1 (bf16)
        pl.BlockSpec((1, h_pad), lambda: (0, 0)),                # b1 (f32)
    ]
    args = [x_p, weights["w1"], weights["b1"]]
    if num_layers > 0:                                            # specialize signature
        in_specs += [
            pl.BlockSpec((num_layers, h_pad, h_pad), lambda: (0, 0, 0)),   # stacked proj_in W
            pl.BlockSpec((num_layers, 1, h_pad), lambda: (0, 0, 0)),       # stacked proj_in b
            pl.BlockSpec((num_layers, h_pad, h_pad), lambda: (0, 0, 0)),   # stacked proj_out W
            pl.BlockSpec((num_layers, 1, h_pad), lambda: (0, 0, 0)),       # stacked proj_out b
        ]
        args += [weights["w_in"], weights["b_in"], weights["w_out"], weights["b_out"]]
    in_specs += [
        pl.BlockSpec((h_pad, n_pad), lambda: (0, 0)),            # w2 (bf16)
        pl.BlockSpec((1, n_pad), lambda: (0, 0)),                # b2 (f32)
    ]
    args += [weights["w2"], weights["b2"]]

    out_p = pl.pallas_call(
        functools.partial(_fused_mlp_kernel, num_layers=num_layers),
        out_shape=jax.ShapeDtypeStruct((m_pad, n_pad), jnp.float32),
        in_specs=in_specs,
        out_specs=pl.BlockSpec((m_pad, n_pad), lambda: (0, 0)),
    )(*args)

    return out_p[:batch, :out_f]


# ------------------------------------ references ----------------------------------------


def dummy_model_forward_ref(params, x, matmul_dtype=jnp.float32):
    """Pure-JAX reference; matmul_dtype=bfloat16 emulates the kernel's MXU precision."""
    def mm(a, w):
        return jnp.dot(a.astype(matmul_dtype), w.astype(matmul_dtype),
                       preferred_element_type=jnp.float32)

    w, b = params["linear_1"]
    h = jnp.maximum(mm(x, w) + b, 0.0)
    for blk in params["blocks"]:
        w1, b1 = blk["proj_in"]
        h = jnp.maximum(mm(h, w1) + b1, 0.0)
        w2, b2 = blk["proj_out"]
        h = mm(h, w2) + b2
    w, b = params["linear_2"]
    return mm(h, w) + b


if __name__ == "__main__":
    in_features, hidden_features, out_features, num_layers = 16, 32, 8, 2
    batch = 4

    key = jax.random.PRNGKey(0)
    k_params, k_x = jax.random.split(key)
    params = init_dummy_model(k_params, in_features, hidden_features, out_features, num_layers)
    x = jax.random.normal(k_x, (batch, in_features), jnp.float32)

    weights, dims = pack_params(params)
    out = jax.block_until_ready(dummy_model_forward(x, weights, dims=dims))
    ref_bf16 = jax.block_until_ready(dummy_model_forward_ref(params, x, jnp.bfloat16))
    ref_f32 = jax.block_until_ready(dummy_model_forward_ref(params, x, jnp.float32))

    assert out.shape == (batch, out_features), out.shape
    # Tight check vs a reference using the same bf16-input / f32-accumulate matmul precision.
    assert jnp.allclose(out, ref_bf16, atol=1e-3, rtol=1e-3), "mismatch vs bf16-precision reference"
    # Loose sanity check vs the full-f32 reference (bounds bf16 rounding error).
    assert jnp.allclose(out, ref_f32, atol=5e-2, rtol=5e-2), "mismatch vs f32 reference"
    print("KERNEL_OK")
</pallas_src>

<mosaic_0001>
module attributes {stable_mosaic.version = 11 : i64} {
  func.func @_fused_mlp_kernel(%arg0: memref<8x128xf32, #tpu.memory_space<vmem>>, %arg1: memref<128x128xbf16, #tpu.memory_space<vmem>>, %arg2: memref<1x128xf32, #tpu.memory_space<vmem>>, %arg3: memref<2x128x128xbf16, #tpu.memory_space<vmem>>, %arg4: memref<2x1x128xf32, #tpu.memory_space<vmem>>, %arg5: memref<2x128x128xbf16, #tpu.memory_space<vmem>>, %arg6: memref<2x1x128xf32, #tpu.memory_space<vmem>>, %arg7: memref<128x128xbf16, #tpu.memory_space<vmem>>, %arg8: memref<1x128xf32, #tpu.memory_space<vmem>>, %arg9: memref<8x128xf32, #tpu.memory_space<vmem>>) attributes {dimension_semantics = [], scalar_prefetch = 0 : i64, scratch_operands = 0 : i64, tpu.core_type = #tpu.core_type<tc>} {
    %c0 = arith.constant 0 : index
    %c0_0 = arith.constant 0 : index
    %0 = vector.load %arg0[%c0, %c0_0] : memref<8x128xf32, #tpu.memory_space<vmem>>, vector<8x128xf32>
    %c0_1 = arith.constant 0 : index
    %c0_2 = arith.constant 0 : index
    %1 = vector.load %arg1[%c0_1, %c0_2] : memref<128x128xbf16, #tpu.memory_space<vmem>>, vector<128x128xbf16>
    %2 = arith.truncf %0 : vector<8x128xf32> to vector<8x128xbf16>
    %cst = arith.constant dense<0.000000e+00> : vector<8x128xf32>
    %3 = tpu.matmul %2, %1, %cst {dimension_numbers = #tpu.dot_dimension_numbers<[1], [0], [0], [1], [0, 0, 1, 1], [], []>} : vector<8x128xbf16>, vector<128x128xbf16>, vector<8x128xf32> -> vector<8x128xf32>
    %c0_3 = arith.constant 0 : index
    %c0_4 = arith.constant 0 : index
    %4 = vector.load %arg2[%c0_3, %c0_4] : memref<1x128xf32, #tpu.memory_space<vmem>>, vector<1x128xf32>
    %5 = vector.broadcast %4 : vector<1x128xf32> to vector<8x128xf32>
    %6 = arith.addf %3, %5 : vector<8x128xf32>
    %cst_5 = arith.constant 0.000000e+00 : f32
    %7 = vector.broadcast %cst_5 : f32 to vector<8x128xf32>
    %8 = arith.maximumf %6, %7 : vector<8x128xf32>
    %c0_6 = arith.constant 0 : index
    %c0_7 = arith.constant 0 : index
    %c0_8 = arith.constant 0 : index
    %9 = vector.load %arg3[%c0_6, %c0_7, %c0_8] : memref<2x128x128xbf16, #tpu.memory_space<vmem>>, vector<1x128x128xbf16>
    %10 = vector.shape_cast %9 : vector<1x128x128xbf16> to vector<128x128xbf16>
    %11 = arith.truncf %8 : vector<8x128xf32> to vector<8x128xbf16>
    %cst_9 = arith.constant dense<0.000000e+00> : vector<8x128xf32>
    %12 = tpu.matmul %11, %10, %cst_9 {dimension_numbers = #tpu.dot_dimension_numbers<[1], [0], [0], [1], [0, 0, 1, 1], [], []>} : vector<8x128xbf16>, vector<128x128xbf16>, vector<8x128xf32> -> vector<8x128xf32>
    %c0_10 = arith.constant 0 : index
    %c0_11 = arith.constant 0 : index
    %c0_12 = arith.constant 0 : index
    %13 = vector.load %arg4[%c0_10, %c0_11, %c0_12] : memref<2x1x128xf32, #tpu.memory_space<vmem>>, vector<1x1x128xf32>
    %14 = vector.shape_cast %13 : vector<1x1x128xf32> to vector<1x128xf32>
    %15 = vector.broadcast %14 : vector<1x128xf32> to vector<8x128xf32>
    %16 = arith.addf %12, %15 : vector<8x128xf32>
    %cst_13 = arith.constant 0.000000e+00 : f32
    %17 = vector.broadcast %cst_13 : f32 to vector<8x128xf32>
    %18 = arith.maximumf %16, %17 : vector<8x128xf32>
    %c0_14 = arith.constant 0 : index
    %c0_15 = arith.constant 0 : index
    %c0_16 = arith.constant 0 : index
    %19 = vector.load %arg5[%c0_14, %c0_15, %c0_16] : memref<2x128x128xbf16, #tpu.memory_space<vmem>>, vector<1x128x128xbf16>
    %20 = vector.shape_cast %19 : vector<1x128x128xbf16> to vector<128x128xbf16>
    %21 = arith.truncf %18 : vector<8x128xf32> to vector<8x128xbf16>
    %cst_17 = arith.constant dense<0.000000e+00> : vector<8x128xf32>
    %22 = tpu.matmul %21, %20, %cst_17 {dimension_numbers = #tpu.dot_dimension_numbers<[1], [0], [0], [1], [0, 0, 1, 1], [], []>} : vector<8x128xbf16>, vector<128x128xbf16>, vector<8x128xf32> -> vector<8x128xf32>
    %c0_18 = arith.constant 0 : index
    %c0_19 = arith.constant 0 : index
    %c0_20 = arith.constant 0 : index
    %23 = vector.load %arg6[%c0_18, %c0_19, %c0_20] : memref<2x1x128xf32, #tpu.memory_space<vmem>>, vector<1x1x128xf32>
    %24 = vector.shape_cast %23 : vector<1x1x128xf32> to vector<1x128xf32>
    %25 = vector.broadcast %24 : vector<1x128xf32> to vector<8x128xf32>
    %26 = arith.addf %22, %25 : vector<8x128xf32>
    %c1 = arith.constant 1 : index
    %c0_21 = arith.constant 0 : index
    %c0_22 = arith.constant 0 : index
    %27 = vector.load %arg3[%c1, %c0_21, %c0_22] : memref<2x128x128xbf16, #tpu.memory_space<vmem>>, vector<1x128x128xbf16>
    %28 = vector.shape_cast %27 : vector<1x128x128xbf16> to vector<128x128xbf16>
    %29 = arith.truncf %26 : vector<8x128xf32> to vector<8x128xbf16>
    %cst_23 = arith.constant dense<0.000000e+00> : vector<8x128xf32>
    %30 = tpu.matmul %29, %28, %cst_23 {dimension_numbers = #tpu.dot_dimension_numbers<[1], [0], [0], [1], [0, 0, 1, 1], [], []>} : vector<8x128xbf16>, vector<128x128xbf16>, vector<8x128xf32> -> vector<8x128xf32>
    %c1_24 = arith.constant 1 : index
    %c0_25 = arith.constant 0 : index
    %c0_26 = arith.constant 0 : index
    %31 = vector.load %arg4[%c1_24, %c0_25, %c0_26] : memref<2x1x128xf32, #tpu.memory_space<vmem>>, vector<1x1x128xf32>
    %32 = vector.shape_cast %31 : vector<1x1x128xf32> to vector<1x128xf32>
    %33 = vector.broadcast %32 : vector<1x128xf32> to vector<8x128xf32>
    %34 = arith.addf %30, %33 : vector<8x128xf32>
    %cst_27 = arith.constant 0.000000e+00 : f32
    %35 = vector.broadcast %cst_27 : f32 to vector<8x128xf32>
    %36 = arith.maximumf %34, %35 : vector<8x128xf32>
    %c1_28 = arith.constant 1 : index
    %c0_29 = arith.constant 0 : index
    %c0_30 = arith.constant 0 : index
    %37 = vector.load %arg5[%c1_28, %c0_29, %c0_30] : memref<2x128x128xbf16, #tpu.memory_space<vmem>>, vector<1x128x128xbf16>
    %38 = vector.shape_cast %37 : vector<1x128x128xbf16> to vector<128x128xbf16>
    %39 = arith.truncf %36 : vector<8x128xf32> to vector<8x128xbf16>
    %cst_31 = arith.constant dense<0.000000e+00> : vector<8x128xf32>
    %40 = tpu.matmul %39, %38, %cst_31 {dimension_numbers = #tpu.dot_dimension_numbers<[1], [0], [0], [1], [0, 0, 1, 1], [], []>} : vector<8x128xbf16>, vector<128x128xbf16>, vector<8x128xf32> -> vector<8x128xf32>
    %c1_32 = arith.constant 1 : index
    %c0_33 = arith.constant 0 : index
    %c0_34 = arith.constant 0 : index
    %41 = vector.load %arg6[%c1_32, %c0_33, %c0_34] : memref<2x1x128xf32, #tpu.memory_space<vmem>>, vector<1x1x128xf32>
    %42 = vector.shape_cast %41 : vector<1x1x128xf32> to vector<1x128xf32>
    %43 = vector.broadcast %42 : vector<1x128xf32> to vector<8x128xf32>
    %44 = arith.addf %40, %43 : vector<8x128xf32>
    %c0_35 = arith.constant 0 : index
    %c0_36 = arith.constant 0 : index
    %45 = vector.load %arg7[%c0_35, %c0_36] : memref<128x128xbf16, #tpu.memory_space<vmem>>, vector<128x128xbf16>
    %46 = arith.truncf %44 : vector<8x128xf32> to vector<8x128xbf16>
    %cst_37 = arith.constant dense<0.000000e+00> : vector<8x128xf32>
    %47 = tpu.matmul %46, %45, %cst_37 {dimension_numbers = #tpu.dot_dimension_numbers<[1], [0], [0], [1], [0, 0, 1, 1], [], []>} : vector<8x128xbf16>, vector<128x128xbf16>, vector<8x128xf32> -> vector<8x128xf32>
    %c0_38 = arith.constant 0 : index
    %c0_39 = arith.constant 0 : index
    %48 = vector.load %arg8[%c0_38, %c0_39] : memref<1x128xf32, #tpu.memory_space<vmem>>, vector<1x128xf32>
    %49 = vector.broadcast %48 : vector<1x128xf32> to vector<8x128xf32>
    %50 = arith.addf %47, %49 : vector<8x128xf32>
    %c0_40 = arith.constant 0 : index
    %c0_41 = arith.constant 0 : index
    %51 = vector.load %arg9[%c0_40, %c0_41] : memref<8x128xf32, #tpu.memory_space<vmem>>, vector<8x128xf32>
    tpu.vector_store %arg9[%c0_40, %c0_41], %50 {strides = array<i32>} : memref<8x128xf32, #tpu.memory_space<vmem>>, vector<8x128xf32>,
    return
  }
}

</mosaic_0001>

<llo_original>
// kernel: dummy_model_forward.1
$region0: #{dummy_model_forward.1}
  #allocation0 [shape = 'u32[]', space=smem, size = 0x4, offset = 0x4, fixed_abs, tag = 'smem constant byte address 0x4 - core index']
  #allocation1 [shape = 'u32[72,128]{1,0:T(1,128)}', space=vmem, size = 0x9000, scoped, tag = 'internal scratch']
  %s0 = inlined_call_operand.vmem [shape: f32[8,128], index: 0, kind: input, shape index: {}]
  %s1 = inlined_call_operand.hbm [shape: bf16[128,128], index: 1, kind: input, shape index: {}]
  %s2 = inlined_call_operand.vmem [shape: f32[1,128], index: 2, kind: input, shape index: {}]
  %s3 = inlined_call_operand.hbm [shape: bf16[2,128,128], index: 3, kind: input, shape index: {}]
  %s4 = inlined_call_operand.vmem [shape: f32[2,1,128], index: 4, kind: input, shape index: {}]
  %s5 = inlined_call_operand.hbm [shape: bf16[2,128,128], index: 5, kind: input, shape index: {}]
  %s6 = inlined_call_operand.vmem [shape: f32[2,1,128], index: 6, kind: input, shape index: {}]
  %s7 = inlined_call_operand.hbm [shape: bf16[128,128], index: 7, kind: input, shape index: {}]
  %s8 = inlined_call_operand.vmem [shape: f32[1,128], index: 8, kind: input, shape index: {}]
  %s9 = inlined_call_operand.vmem [shape: f32[8,128], index: 9, kind: output, shape index: {}]
  %s10 = sld [smem:[#allocation0]]
  $region62: #{dummy_model_forward.1} parent=0
    _
  %s12 = ssub.s32 1, %s10
  %s13 = scalar_select 0, %s12, %s10
  $region1: #{dummy_model_forward.1} parent=0
    #allocation2 [shape = 'u8[32768]{0}', space=vmem, size = 0x8000, scoped, tag = 'input window, operand 1, single buffered']
    #allocation3 [shape = 's32[1]{0}', space=sflag, size = 0x4, scoped, tag = 'scoped memory for dummy_model_forward.1']
    #allocation4 [shape = 'u8[65536]{0}', space=vmem, size = 0x10000, scoped, tag = 'input window, operand 3, single buffered']
    #allocation5 [shape = 's32[1]{0}', space=sflag, size = 0x4, scoped, tag = 'scoped memory for dummy_model_forward.1']
    #allocation6 [shape = 'u8[65536]{0}', space=vmem, size = 0x10000, scoped, tag = 'input window, operand 5, single buffered']
    #allocation7 [shape = 'u8[32768]{0}', space=vmem, size = 0x8000, scoped, tag = 'input window, operand 7, single buffered']
    #allocation8 [shape = 's32[1]{0}', space=sflag, size = 0x4, scoped, tag = 'scoped memory for dummy_model_forward.1']
    %14 = vsyncpa [#allocation3], 0
    %15 = vsyncpa [#allocation5], 0
    %16 = vsyncpa [#allocation8], 0
    // Predicated region
    $region2: #{dummy_model_forward.1} parent=1 // pred_check
      _
    $region3: #{dummy_model_forward.1} parent=1 // pred_check_branch
      %18 = sbr.rel (0) target = $region5
    $region4: #{dummy_model_forward.1} parent=1 // pred_region
      _
    $region5: #{dummy_model_forward.1} parent=1 // pred_fallthru
      _
    // Predicated region
    $region6: #{dummy_model_forward.1} parent=1 // pred_check
      _
    $region7: #{dummy_model_forward.1} parent=1 // pred_check_branch
      %20 = sbr.rel (0) target = $region9
    $region8: #{dummy_model_forward.1} parent=1 // pred_region
      %22 = vsyncadd [#allocation3], 0
      %s23 = sshll.u32 %s1, 4
      %s24 = int_to_ptr.hbm [resolvable:$true] %s23
      %s25 = sshll.u32 [#allocation2], 4
      %s26 = int_to_ptr.vmem [resolvable:$true] %s25
      %31 = dma.hbm_to_vmem [thread:$0]  %s24, 1024, %s26, [#allocation3], 64, 64, 4
    $region9: #{dummy_model_forward.1} parent=1 // pred_fallthru
      _
    // Predicated region
    $region10: #{dummy_model_forward.1} parent=1 // pred_check
      _
    $region11: #{dummy_model_forward.1} parent=1 // pred_check_branch
      %33 = sbr.rel (0) target = $region13
    $region12: #{dummy_model_forward.1} parent=1 // pred_region
      _
    $region13: #{dummy_model_forward.1} parent=1 // pred_fallthru
      _
    // Predicated region
    $region14: #{dummy_model_forward.1} parent=1 // pred_check
      _
    $region15: #{dummy_model_forward.1} parent=1 // pred_check_branch
      %35 = sbr.rel (0) target = $region17
    $region16: #{dummy_model_forward.1} parent=1 // pred_region
      %37 = vsyncadd [#allocation5], 0
      %s38 = sshll.u32 %s3, 4
      %s39 = int_to_ptr.hbm [resolvable:$true] %s38
      %s40 = sshll.u32 [#allocation4], 4
      %s41 = int_to_ptr.vmem [resolvable:$true] %s40
      %46 = dma.hbm_to_vmem [thread:$0]  %s39, 2048, %s41, [#allocation5], 64, 64, 4
    $region17: #{dummy_model_forward.1} parent=1 // pred_fallthru
      _
    // Predicated region
    $region18: #{dummy_model_forward.1} parent=1 // pred_check
      _
    $region19: #{dummy_model_forward.1} parent=1 // pred_check_branch
      %48 = sbr.rel (0) target = $region21
    $region20: #{dummy_model_forward.1} parent=1 // pred_region
      _
    $region21: #{dummy_model_forward.1} parent=1 // pred_fallthru
      _
    // Predicated region
    $region22: #{dummy_model_forward.1} parent=1 // pred_check
      _
    $region23: #{dummy_model_forward.1} parent=1 // pred_check_branch
      %50 = sbr.rel (0) target = $region25
    $region24: #{dummy_model_forward.1} parent=1 // pred_region
      %52 = vsyncadd [#allocation5], 0
      %s53 = sshll.u32 %s5, 4
      %s54 = int_to_ptr.hbm [resolvable:$true] %s53
      %s55 = sshll.u32 [#allocation6], 4
      %s56 = int_to_ptr.vmem [resolvable:$true] %s55
      %61 = dma.hbm_to_vmem [thread:$0]  %s54, 2048, %s56, [#allocation5], 64, 64, 4
    $region25: #{dummy_model_forward.1} parent=1 // pred_fallthru
      _
    // Predicated region
    $region26: #{dummy_model_forward.1} parent=1 // pred_check
      _
    $region27: #{dummy_model_forward.1} parent=1 // pred_check_branch
      %63 = sbr.rel (0) target = $region29
    $region28: #{dummy_model_forward.1} parent=1 // pred_region
      _
    $region29: #{dummy_model_forward.1} parent=1 // pred_fallthru
      _
    // Predicated region
    $region30: #{dummy_model_forward.1} parent=1 // pred_check
      _
    $region31: #{dummy_model_forward.1} parent=1 // pred_check_branch
      %65 = sbr.rel (0) target = $region33
    $region32: #{dummy_model_forward.1} parent=1 // pred_region
      %67 = vsyncadd [#allocation8], 0
      %s68 = sshll.u32 %s7, 4
      %s69 = int_to_ptr.hbm [resolvable:$true] %s68
      %s70 = sshll.u32 [#allocation7], 4
      %s71 = int_to_ptr.vmem [resolvable:$true] %s70
      %76 = dma.hbm_to_vmem [thread:$0]  %s69, 1024, %s71, [#allocation8], 64, 64, 4
    $region33: #{dummy_model_forward.1} parent=1 // pred_fallthru
      _
    // Predicated region
    $region34: #{dummy_model_forward.1} parent=1 // pred_check
      _
    $region35: #{dummy_model_forward.1} parent=1 // pred_check_branch
      %78 = sbr.rel (0) target = $region37
    $region36: #{dummy_model_forward.1} parent=1 // pred_region
      _
    $region37: #{dummy_model_forward.1} parent=1 // pred_fallthru
      _
    // Predicated region
    $region38: #{dummy_model_forward.1} parent=1 // pred_check
      _
    $region39: #{dummy_model_forward.1} parent=1 // pred_check_branch
      %80 = sbr.rel (0) target = $region41
    $region40: #{dummy_model_forward.1} parent=1 // pred_region
      %82 = dma.done [#allocation3], 1024
    $region41: #{dummy_model_forward.1} parent=1 // pred_fallthru
      _
    // Predicated region
    $region42: #{dummy_model_forward.1} parent=1 // pred_check
      _
    $region43: #{dummy_model_forward.1} parent=1 // pred_check_branch
      %84 = sbr.rel (0) target = $region45
    $region44: #{dummy_model_forward.1} parent=1 // pred_region
      %86 = dma.done [#allocation5], 2048
    $region45: #{dummy_model_forward.1} parent=1 // pred_fallthru
      _
    // Predicated region
    $region46: #{dummy_model_forward.1} parent=1 // pred_check
      _
    $region47: #{dummy_model_forward.1} parent=1 // pred_check_branch
      %88 = sbr.rel (0) target = $region49
    $region48: #{dummy_model_forward.1} parent=1 // pred_region
      %90 = dma.done [#allocation5], 2048
    $region49: #{dummy_model_forward.1} parent=1 // pred_fallthru
      _
    // Predicated region
    $region50: #{dummy_model_forward.1} parent=1 // pred_check
      _
    $region51: #{dummy_model_forward.1} parent=1 // pred_check_branch
      %92 = sbr.rel (0) target = $region53
    $region52: #{dummy_model_forward.1} parent=1 // pred_region
      %94 = dma.done [#allocation8], 1024
    $region53: #{dummy_model_forward.1} parent=1 // pred_fallthru
      _
    %v95 = vld [vmem:[%s0] sm:$0xff]
    %v96 = vld [vmem:[#allocation2] sm:$0xf]
    %v97 = vld [vmem:[#allocation2 + $0x4] sm:$0xf]
    %v98 = vld [vmem:[#allocation2 + $0x8] sm:$0xf]
    %v99 = vld [vmem:[#allocation2 + $0xc] sm:$0xf]
    %v100 = vld [vmem:[#allocation2 + $0x10] sm:$0xf]
    %v101 = vld [vmem:[#allocation2 + $0x14] sm:$0xf]
    %v102 = vld [vmem:[#allocation2 + $0x18] sm:$0xf]
    %v103 = vld [vmem:[#allocation2 + $0x1c] sm:$0xf]
    %v104 = vld [vmem:[#allocation2 + $0x20] sm:$0xf]
    %v105 = vld [vmem:[#allocation2 + $0x24] sm:$0xf]
    %v106 = vld [vmem:[#allocation2 + $0x28] sm:$0xf]
    %v107 = vld [vmem:[#allocation2 + $0x2c] sm:$0xf]
    %v108 = vld [vmem:[#allocation2 + $0x30] sm:$0xf]
    %v109 = vld [vmem:[#allocation2 + $0x34] sm:$0xf]
    %v110 = vld [vmem:[#allocation2 + $0x38] sm:$0xf]
    %v111 = vld [vmem:[#allocation2 + $0x3c] sm:$0xf]
    %v112 = vpack.c.bf16 %v95, %v95
    %v113 = vld [vmem:[%s2] sm:$0x1]
    %v115 = vperm.slane %v113, 0
    %v133 = vunpack.c.l.b16 %v96
    %v134 = vunpack.c.l.b16 %v97
    %v135 = vunpack.c.l.b16 %v98
    %v136 = vunpack.c.l.b16 %v99
    %v137 = vunpack.c.l.b16 %v100
    %v138 = vunpack.c.l.b16 %v101
    %v139 = vunpack.c.l.b16 %v102
    %v140 = vunpack.c.l.b16 %v103
    %v141 = vunpack.c.l.b16 %v104
    %v142 = vunpack.c.l.b16 %v105
    %v143 = vunpack.c.l.b16 %v106
    %v144 = vunpack.c.l.b16 %v107
    %v145 = vunpack.c.l.b16 %v108
    %v146 = vunpack.c.l.b16 %v109
    %v147 = vunpack.c.l.b16 %v110
    %v148 = vunpack.c.l.b16 %v111
    %v149 = vpack.c.b16 %v134, %v133
    %v150 = vpack.c.b16 %v136, %v135
    %v151 = vpack.c.b16 %v138, %v137
    %v152 = vpack.c.b16 %v140, %v139
    %v153 = vpack.c.b16 %v142, %v141
    %v154 = vpack.c.b16 %v144, %v143
    %v155 = vpack.c.b16 %v146, %v145
    %v156 = vpack.c.b16 %v148, %v147
    %165 = vmatpush.bf16.msra.mxu0 %v156
    %166 = vmatpush.bf16.msra.mxu0 %v155
    %167 = vmatpush.bf16.msra.mxu0 %v154
    %168 = vmatpush.bf16.msra.mxu0 %v153
    %169 = vmatpush.bf16.msra.mxu0 %v152
    %170 = vmatpush.bf16.msra.mxu0 %v151
    %171 = vmatpush.bf16.msra.mxu0 %v150
    %172 = vmatpush.bf16.msra.mxu0 %v149
    %173 = vmatmul.bf16.gmra.mxu0 %v112
    %v174 = vpop.f32.mrf.mxu0
    %v175 = vadd.f32 %v115, %v174
    %v176 = vpop.f32.mrf.mxu0
    %177 = vdwg.mxu0
    %v178 = vmax.f32 %v175, 0.0
    %v179 = vld [vmem:[#allocation4] sm:$0xf]
    %v180 = vld [vmem:[#allocation4 + $0x4] sm:$0xf]
    %v181 = vld [vmem:[#allocation4 + $0x8] sm:$0xf]
    %v182 = vld [vmem:[#allocation4 + $0xc] sm:$0xf]
    %v183 = vld [vmem:[#allocation4 + $0x10] sm:$0xf]
    %v184 = vld [vmem:[#allocation4 + $0x14] sm:$0xf]
    %v185 = vld [vmem:[#allocation4 + $0x18] sm:$0xf]
    %v186 = vld [vmem:[#allocation4 + $0x1c] sm:$0xf]
    %v187 = vld [vmem:[#allocation4 + $0x20] sm:$0xf]
    %v188 = vld [vmem:[#allocation4 + $0x24] sm:$0xf]
    %v189 = vld [vmem:[#allocation4 + $0x28] sm:$0xf]
    %v190 = vld [vmem:[#allocation4 + $0x2c] sm:$0xf]
    %v191 = vld [vmem:[#allocation4 + $0x30] sm:$0xf]
    %v192 = vld [vmem:[#allocation4 + $0x34] sm:$0xf]
    %v193 = vld [vmem:[#allocation4 + $0x38] sm:$0xf]
    %v194 = vld [vmem:[#allocation4 + $0x3c] sm:$0xf]
    %v195 = vpack.c.bf16 %v178, %v178
    %v196 = vld [vmem:[%s4] sm:$0x1]
    %v198 = vperm.slane %v196, 0
    %v216 = vunpack.c.l.b16 %v179
    %v217 = vunpack.c.l.b16 %v180
    %v218 = vunpack.c.l.b16 %v181
    %v219 = vunpack.c.l.b16 %v182
    %v220 = vunpack.c.l.b16 %v183
    %v221 = vunpack.c.l.b16 %v184
    %v222 = vunpack.c.l.b16 %v185
    %v223 = vunpack.c.l.b16 %v186
    %v224 = vunpack.c.l.b16 %v187
    %v225 = vunpack.c.l.b16 %v188
    %v226 = vunpack.c.l.b16 %v189
    %v227 = vunpack.c.l.b16 %v190
    %v228 = vunpack.c.l.b16 %v191
    %v229 = vunpack.c.l.b16 %v192
    %v230 = vunpack.c.l.b16 %v193
    %v231 = vunpack.c.l.b16 %v194
    %v232 = vpack.c.b16 %v217, %v216
    %v233 = vpack.c.b16 %v219, %v218
    %v234 = vpack.c.b16 %v221, %v220
    %v235 = vpack.c.b16 %v223, %v222
    %v236 = vpack.c.b16 %v225, %v224
    %v237 = vpack.c.b16 %v227, %v226
    %v238 = vpack.c.b16 %v229, %v228
    %v239 = vpack.c.b16 %v231, %v230
    %248 = vmatpush.bf16.msra.mxu0 %v239
    %249 = vmatpush.bf16.msra.mxu0 %v238
    %250 = vmatpush.bf16.msra.mxu0 %v237
    %251 = vmatpush.bf16.msra.mxu0 %v236
    %252 = vmatpush.bf16.msra.mxu0 %v235
    %253 = vmatpush.bf16.msra.mxu0 %v234
    %254 = vmatpush.bf16.msra.mxu0 %v233
    %255 = vmatpush.bf16.msra.mxu0 %v232
    %256 = vmatmul.bf16.gmra.mxu0 %v195
    %v257 = vpop.f32.mrf.mxu0
    %v258 = vadd.f32 %v198, %v257
    %v259 = vpop.f32.mrf.mxu0
    %260 = vdwg.mxu0
    %v261 = vmax.f32 %v258, 0.0
    %v262 = vld [vmem:[#allocation6] sm:$0xf]
    %v263 = vld [vmem:[#allocation6 + $0x4] sm:$0xf]
    %v264 = vld [vmem:[#allocation6 + $0x8] sm:$0xf]
    %v265 = vld [vmem:[#allocation6 + $0xc] sm:$0xf]
    %v266 = vld [vmem:[#allocation6 + $0x10] sm:$0xf]
    %v267 = vld [vmem:[#allocation6 + $0x14] sm:$0xf]
    %v268 = vld [vmem:[#allocation6 + $0x18] sm:$0xf]
    %v269 = vld [vmem:[#allocation6 + $0x1c] sm:$0xf]
    %v270 = vld [vmem:[#allocation6 + $0x20] sm:$0xf]
    %v271 = vld [vmem:[#allocation6 + $0x24] sm:$0xf]
    %v272 = vld [vmem:[#allocation6 + $0x28] sm:$0xf]
    %v273 = vld [vmem:[#allocation6 + $0x2c] sm:$0xf]
    %v274 = vld [vmem:[#allocation6 + $0x30] sm:$0xf]
    %v275 = vld [vmem:[#allocation6 + $0x34] sm:$0xf]
    %v276 = vld [vmem:[#allocation6 + $0x38] sm:$0xf]
    %v277 = vld [vmem:[#allocation6 + $0x3c] sm:$0xf]
    %v278 = vpack.c.bf16 %v261, %v261
    %v279 = vld [vmem:[%s6] sm:$0x1]
    %v281 = vperm.slane %v279, 0
    %v299 = vunpack.c.l.b16 %v262
    %v300 = vunpack.c.l.b16 %v263
    %v301 = vunpack.c.l.b16 %v264
    %v302 = vunpack.c.l.b16 %v265
    %v303 = vunpack.c.l.b16 %v266
    %v304 = vunpack.c.l.b16 %v267
    %v305 = vunpack.c.l.b16 %v268
    %v306 = vunpack.c.l.b16 %v269
    %v307 = vunpack.c.l.b16 %v270
    %v308 = vunpack.c.l.b16 %v271
    %v309 = vunpack.c.l.b16 %v272
    %v310 = vunpack.c.l.b16 %v273
    %v311 = vunpack.c.l.b16 %v274
    %v312 = vunpack.c.l.b16 %v275
    %v313 = vunpack.c.l.b16 %v276
    %v314 = vunpack.c.l.b16 %v277
    %v315 = vpack.c.b16 %v300, %v299
    %v316 = vpack.c.b16 %v302, %v301
    %v317 = vpack.c.b16 %v304, %v303
    %v318 = vpack.c.b16 %v306, %v305
    %v319 = vpack.c.b16 %v308, %v307
    %v320 = vpack.c.b16 %v310, %v309
    %v321 = vpack.c.b16 %v312, %v311
    %v322 = vpack.c.b16 %v314, %v313
    %331 = vmatpush.bf16.msra.mxu0 %v322
    %332 = vmatpush.bf16.msra.mxu0 %v321
    %333 = vmatpush.bf16.msra.mxu0 %v320
    %334 = vmatpush.bf16.msra.mxu0 %v319
    %335 = vmatpush.bf16.msra.mxu0 %v318
    %336 = vmatpush.bf16.msra.mxu0 %v317
    %337 = vmatpush.bf16.msra.mxu0 %v316
    %338 = vmatpush.bf16.msra.mxu0 %v315
    %339 = vmatmul.bf16.gmra.mxu0 %v278
    %v340 = vpop.f32.mrf.mxu0
    %v341 = vadd.f32 %v281, %v340
    %v342 = vpop.f32.mrf.mxu0
    %343 = vdwg.mxu0
    %s344 = scalar_lea.vmem [#allocation4], 64
    %v345 = vld [vmem:[%s344] sm:$0xf]
    %v346 = vld [vmem:[%s344 + $0x4] sm:$0xf]
    %v347 = vld [vmem:[%s344 + $0x8] sm:$0xf]
    %v348 = vld [vmem:[%s344 + $0xc] sm:$0xf]
    %v349 = vld [vmem:[%s344 + $0x10] sm:$0xf]
    %v350 = vld [vmem:[%s344 + $0x14] sm:$0xf]
    %v351 = vld [vmem:[%s344 + $0x18] sm:$0xf]
    %v352 = vld [vmem:[%s344 + $0x1c] sm:$0xf]
    %v353 = vld [vmem:[%s344 + $0x20] sm:$0xf]
    %v354 = vld [vmem:[%s344 + $0x24] sm:$0xf]
    %v355 = vld [vmem:[%s344 + $0x28] sm:$0xf]
    %v356 = vld [vmem:[%s344 + $0x2c] sm:$0xf]
    %v357 = vld [vmem:[%s344 + $0x30] sm:$0xf]
    %v358 = vld [vmem:[%s344 + $0x34] sm:$0xf]
    %v359 = vld [vmem:[%s344 + $0x38] sm:$0xf]
    %v360 = vld [vmem:[%s344 + $0x3c] sm:$0xf]
    %v361 = vpack.c.bf16 %v341, %v341
    %s362 = scalar_lea.vmem %s4, 1
    %v363 = vld [vmem:[%s362] sm:$0x1]
    %v365 = vperm.slane %v363, 0
    %v383 = vunpack.c.l.b16 %v345
    %v384 = vunpack.c.l.b16 %v346
    %v385 = vunpack.c.l.b16 %v347
    %v386 = vunpack.c.l.b16 %v348
    %v387 = vunpack.c.l.b16 %v349
    %v388 = vunpack.c.l.b16 %v350
    %v389 = vunpack.c.l.b16 %v351
    %v390 = vunpack.c.l.b16 %v352
    %v391 = vunpack.c.l.b16 %v353
    %v392 = vunpack.c.l.b16 %v354
    %v393 = vunpack.c.l.b16 %v355
    %v394 = vunpack.c.l.b16 %v356
    %v395 = vunpack.c.l.b16 %v357
    %v396 = vunpack.c.l.b16 %v358
    %v397 = vunpack.c.l.b16 %v359
    %v398 = vunpack.c.l.b16 %v360
    %v399 = vpack.c.b16 %v384, %v383
    %v400 = vpack.c.b16 %v386, %v385
    %v401 = vpack.c.b16 %v388, %v387
    %v402 = vpack.c.b16 %v390, %v389
    %v403 = vpack.c.b16 %v392, %v391
    %v404 = vpack.c.b16 %v394, %v393
    %v405 = vpack.c.b16 %v396, %v395
    %v406 = vpack.c.b16 %v398, %v397
    %415 = vmatpush.bf16.msra.mxu0 %v406
    %416 = vmatpush.bf16.msra.mxu0 %v405
    %417 = vmatpush.bf16.msra.mxu0 %v404
    %418 = vmatpush.bf16.msra.mxu0 %v403
    %419 = vmatpush.bf16.msra.mxu0 %v402
    %420 = vmatpush.bf16.msra.mxu0 %v401
    %421 = vmatpush.bf16.msra.mxu0 %v400
    %422 = vmatpush.bf16.msra.mxu0 %v399
    %423 = vmatmul.bf16.gmra.mxu0 %v361
    %v424 = vpop.f32.mrf.mxu0
    %v425 = vadd.f32 %v365, %v424
    %v426 = vpop.f32.mrf.mxu0
    %427 = vdwg.mxu0
    %v428 = vmax.f32 %v425, 0.0
    %s429 = scalar_lea.vmem [#allocation6], 64
    %v430 = vld [vmem:[%s429] sm:$0xf]
    %v431 = vld [vmem:[%s429 + $0x4] sm:$0xf]
    %v432 = vld [vmem:[%s429 + $0x8] sm:$0xf]
    %v433 = vld [vmem:[%s429 + $0xc] sm:$0xf]
    %v434 = vld [vmem:[%s429 + $0x10] sm:$0xf]
    %v435 = vld [vmem:[%s429 + $0x14] sm:$0xf]
    %v436 = vld [vmem:[%s429 + $0x18] sm:$0xf]
    %v437 = vld [vmem:[%s429 + $0x1c] sm:$0xf]
    %v438 = vld [vmem:[%s429 + $0x20] sm:$0xf]
    %v439 = vld [vmem:[%s429 + $0x24] sm:$0xf]
    %v440 = vld [vmem:[%s429 + $0x28] sm:$0xf]
    %v441 = vld [vmem:[%s429 + $0x2c] sm:$0xf]
    %v442 = vld [vmem:[%s429 + $0x30] sm:$0xf]
    %v443 = vld [vmem:[%s429 + $0x34] sm:$0xf]
    %v444 = vld [vmem:[%s429 + $0x38] sm:$0xf]
    %v445 = vld [vmem:[%s429 + $0x3c] sm:$0xf]
    %v446 = vpack.c.bf16 %v428, %v428
    %s447 = scalar_lea.vmem %s6, 1
    %v448 = vld [vmem:[%s447] sm:$0x1]
    %v450 = vperm.slane %v448, 0
    %v468 = vunpack.c.l.b16 %v430
    %v469 = vunpack.c.l.b16 %v431
    %v470 = vunpack.c.l.b16 %v432
    %v471 = vunpack.c.l.b16 %v433
    %v472 = vunpack.c.l.b16 %v434
    %v473 = vunpack.c.l.b16 %v435
    %v474 = vunpack.c.l.b16 %v436
    %v475 = vunpack.c.l.b16 %v437
    %v476 = vunpack.c.l.b16 %v438
    %v477 = vunpack.c.l.b16 %v439
    %v478 = vunpack.c.l.b16 %v440
    %v479 = vunpack.c.l.b16 %v441
    %v480 = vunpack.c.l.b16 %v442
    %v481 = vunpack.c.l.b16 %v443
    %v482 = vunpack.c.l.b16 %v444
    %v483 = vunpack.c.l.b16 %v445
    %v484 = vpack.c.b16 %v469, %v468
    %v485 = vpack.c.b16 %v471, %v470
    %v486 = vpack.c.b16 %v473, %v472
    %v487 = vpack.c.b16 %v475, %v474
    %v488 = vpack.c.b16 %v477, %v476
    %v489 = vpack.c.b16 %v479, %v478
    %v490 = vpack.c.b16 %v481, %v480
    %v491 = vpack.c.b16 %v483, %v482
    %500 = vmatpush.bf16.msra.mxu0 %v491
    %501 = vmatpush.bf16.msra.mxu0 %v490
    %502 = vmatpush.bf16.msra.mxu0 %v489
    %503 = vmatpush.bf16.msra.mxu0 %v488
    %504 = vmatpush.bf16.msra.mxu0 %v487
    %505 = vmatpush.bf16.msra.mxu0 %v486
    %506 = vmatpush.bf16.msra.mxu0 %v485
    %507 = vmatpush.bf16.msra.mxu0 %v484
    %508 = vmatmul.bf16.gmra.mxu0 %v446
    %v509 = vpop.f32.mrf.mxu0
    %v510 = vadd.f32 %v450, %v509
    %v511 = vpop.f32.mrf.mxu0
    %512 = vdwg.mxu0
    %v513 = vld [vmem:[#allocation7] sm:$0xf]
    %v514 = vld [vmem:[#allocation7 + $0x4] sm:$0xf]
    %v515 = vld [vmem:[#allocation7 + $0x8] sm:$0xf]
    %v516 = vld [vmem:[#allocation7 + $0xc] sm:$0xf]
    %v517 = vld [vmem:[#allocation7 + $0x10] sm:$0xf]
    %v518 = vld [vmem:[#allocation7 + $0x14] sm:$0xf]
    %v519 = vld [vmem:[#allocation7 + $0x18] sm:$0xf]
    %v520 = vld [vmem:[#allocation7 + $0x1c] sm:$0xf]
    %v521 = vld [vmem:[#allocation7 + $0x20] sm:$0xf]
    %v522 = vld [vmem:[#allocation7 + $0x24] sm:$0xf]
    %v523 = vld [vmem:[#allocation7 + $0x28] sm:$0xf]
    %v524 = vld [vmem:[#allocation7 + $0x2c] sm:$0xf]
    %v525 = vld [vmem:[#allocation7 + $0x30] sm:$0xf]
    %v526 = vld [vmem:[#allocation7 + $0x34] sm:$0xf]
    %v527 = vld [vmem:[#allocation7 + $0x38] sm:$0xf]
    %v528 = vld [vmem:[#allocation7 + $0x3c] sm:$0xf]
    %v529 = vpack.c.bf16 %v510, %v510
    %v530 = vld [vmem:[%s8] sm:$0x1]
    %v532 = vperm.slane %v530, 0
    %v550 = vunpack.c.l.b16 %v513
    %v551 = vunpack.c.l.b16 %v514
    %v552 = vunpack.c.l.b16 %v515
    %v553 = vunpack.c.l.b16 %v516
    %v554 = vunpack.c.l.b16 %v517
    %v555 = vunpack.c.l.b16 %v518
    %v556 = vunpack.c.l.b16 %v519
    %v557 = vunpack.c.l.b16 %v520
    %v558 = vunpack.c.l.b16 %v521
    %v559 = vunpack.c.l.b16 %v522
    %v560 = vunpack.c.l.b16 %v523
    %v561 = vunpack.c.l.b16 %v524
    %v562 = vunpack.c.l.b16 %v525
    %v563 = vunpack.c.l.b16 %v526
    %v564 = vunpack.c.l.b16 %v527
    %v565 = vunpack.c.l.b16 %v528
    %v566 = vpack.c.b16 %v551, %v550
    %v567 = vpack.c.b16 %v553, %v552
    %v568 = vpack.c.b16 %v555, %v554
    %v569 = vpack.c.b16 %v557, %v556
    %v570 = vpack.c.b16 %v559, %v558
    %v571 = vpack.c.b16 %v561, %v560
    %v572 = vpack.c.b16 %v563, %v562
    %v573 = vpack.c.b16 %v565, %v564
    %582 = vmatpush.bf16.msra.mxu0 %v573
    %583 = vmatpush.bf16.msra.mxu0 %v572
    %584 = vmatpush.bf16.msra.mxu0 %v571
    %585 = vmatpush.bf16.msra.mxu0 %v570
    %586 = vmatpush.bf16.msra.mxu0 %v569
    %587 = vmatpush.bf16.msra.mxu0 %v568
    %588 = vmatpush.bf16.msra.mxu0 %v567
    %589 = vmatpush.bf16.msra.mxu0 %v566
    %590 = vmatmul.bf16.gmra.mxu0 %v529
    %v591 = vpop.f32.mrf.mxu0
    %v592 = vadd.f32 %v532, %v591
    %v593 = vpop.f32.mrf.mxu0
    %594 = vdwg.mxu0
    %595 = vst [vmem:[%s9] sm:$0xff] %v592
    // Predicated region
    $region54: #{dummy_model_forward.1} parent=1 // pred_check
      _
    $region55: #{dummy_model_forward.1} parent=1 // pred_check_branch
      %597 = sbr.rel (0) target = $region57
    $region56: #{dummy_model_forward.1} parent=1 // pred_region
      _
    $region57: #{dummy_model_forward.1} parent=1 // pred_fallthru
      _
    // Predicated region
    $region58: #{dummy_model_forward.1} parent=1 // pred_check
      _
    $region59: #{dummy_model_forward.1} parent=1 // pred_check_branch
      %599 = sbr.rel (0) target = $region61
    $region60: #{dummy_model_forward.1} parent=1 // pred_region
      _
    $region61: #{dummy_model_forward.1} parent=1 // pred_fallthru
      _
    %600 = vsyncpa [#allocation3], 1
    %601 = vsyncpa [#allocation5], 1
    %602 = vsyncpa [#allocation8], 1

</llo_original>
